<compile_context>
chip_gen: v6e
topology: v6e:2x2x1
jax: 0.10.0
libtpu: 0.0.40
codegen_flags: <defaults>
</compile_context>

<pallas_src>
import jax
import jax.numpy as jnp
from jax.experimental import pallas as pl
from jax.experimental.pallas import tpu as pltpu

LANES = 128
SUBLANES = 8
MAX_BLOCK_ROWS = 8192           # 8192 x 128 x 4 B = 4 MiB per f32 block
SMALL_N_FAST_PATH = 1 << 17     # below this, fused XLA beats kernel launch


def linear_kernel(x_ref, w_ref, b_ref, o_ref):
    # x_ref / o_ref: (block_rows, 128) f32 in VMEM (lane-dense).
    # w_ref / b_ref: (1,) f32 scalars in SMEM.
    # Pure VPU fused multiply-add; the scalar splat is hoisted by the compiler.
    o_ref[...] = x_ref[...] * w_ref[0] + b_ref[0]


def _choose_block_rows(rows: int) -> int:
    """Sublane-aligned block row count, <= MAX_BLOCK_ROWS, and >= 2 grid
    blocks whenever possible so both v7x TensorCores get work."""
    if rows < 2 * SUBLANES:
        return rows                                   # single full-extent block
    half = (rows // 2) // SUBLANES * SUBLANES
    return max(SUBLANES, min(MAX_BLOCK_ROWS, half))


def _linear_pallas(x, w_s, b_s):
    n = x.shape[0] * x.shape[1]
    aligned = (n % LANES == 0)

    if aligned:
        rows = n // LANES
        x2d = x.reshape(rows, LANES)                  # free reshape, no copy
    else:
        rows = pl.cdiv(n, LANES)
        rows = ((rows + SUBLANES - 1) // SUBLANES) * SUBLANES
        # TODO(synk): for huge ragged N, masking the tail inside the kernel
        # (n via SMEM scalar + masked store) would avoid this pad copy and the
        # slice-back below; ragged N is the only remaining extra-traffic path.
        x2d = jnp.pad(x.reshape(-1), (0, rows * LANES - n)).reshape(rows, LANES)

    block_rows = _choose_block_rows(rows)
    grid = (pl.cdiv(rows, block_rows),)               # partial last block is OK

    out2d = pl.pallas_call(
        linear_kernel,
        out_shape=jax.ShapeDtypeStruct((rows, LANES), jnp.float32),
        grid=grid,
        in_specs=[
            pl.BlockSpec((block_rows, LANES), lambda i: (i, 0)),
            pl.BlockSpec(memory_space=pltpu.MemorySpace.SMEM),
            pl.BlockSpec(memory_space=pltpu.MemorySpace.SMEM),
        ],
        out_specs=pl.BlockSpec((block_rows, LANES), lambda i: (i, 0)),
        compiler_params=pltpu.CompilerParams(
            dimension_semantics=("parallel",),
        ),
    )(x2d, w_s, b_s)

    if aligned:
        return out2d.reshape(n, 1)                    # free reshape, no copy
    return out2d.reshape(-1)[:n].reshape(n, 1)


def linear_regression_forward(x, weight, bias, *, force_pallas=False):
    """x: (N, 1) f32; weight: (1, 1) f32 (nn.Linear.weight); bias: (1,) f32.

    Returns (N, 1) f32, matching torch's `self.linear(x)` = x @ W^T + b.
    """
    x = x.astype(jnp.float32)
    w_s = weight.reshape(1).astype(jnp.float32)       # scalar -> SMEM
    b_s = bias.reshape(1).astype(jnp.float32)         # scalar -> SMEM

    n_elems = x.shape[0] * x.shape[1]
    if not force_pallas and n_elems < SMALL_N_FAST_PATH:
        # Tiny inputs: pallas_call launch overhead dominates; fused XLA wins.
        return x * w_s[0] + b_s[0]
    return _linear_pallas(x, w_s, b_s)


if __name__ == "__main__":
    key = jax.random.PRNGKey(0)
    kx, kw, kb = jax.random.split(key, 3)

    # nn.Linear(1, 1) init: U(-1/sqrt(in_features), 1/sqrt(in_features)), in_features = 1.
    weight = jax.random.uniform(kw, (1, 1), dtype=jnp.float32, minval=-1.0, maxval=1.0)
    bias = jax.random.uniform(kb, (1,), dtype=jnp.float32, minval=-1.0, maxval=1.0)

    # N = 175 mirrors the original script's x[0:175].view(-1, 1); the other two
    # sizes exercise the zero-copy aligned path, the >=2-block (v7x megacore)
    # path, and the partial-last-block path.
    for n in (175, 2048, 2432):
        x = jax.random.normal(kx, (n, 1), dtype=jnp.float32)

        y = jax.block_until_ready(
            linear_regression_forward(x, weight, bias, force_pallas=True))

        y_ref = x @ weight.T + bias
        assert y.shape == (n, 1), f"bad output shape {y.shape} for N={n}"
        assert jnp.allclose(y, y_ref, atol=1e-6), f"mismatch vs reference for N={n}"

        # Small-N fused-XLA fast path must agree as well.
        y_fast = linear_regression_forward(x, weight, bias)
        assert jnp.allclose(y_fast, y_ref, atol=1e-6), f"fast-path mismatch for N={n}"

    print("KERNEL_OK")
</pallas_src>

<mosaic_0001>
module attributes {stable_mosaic.version = 11 : i64} {
  func.func @linear_kernel(%arg0: i32, %arg1: memref<8x128xf32, #tpu.memory_space<vmem>>, %arg2: memref<1xf32, #tpu.memory_space<smem>>, %arg3: memref<1xf32, #tpu.memory_space<smem>>, %arg4: memref<8x128xf32, #tpu.memory_space<vmem>>) attributes {dimension_semantics = [#tpu.dimension_semantics<parallel>], iteration_bounds = array<i64: 1>, scalar_prefetch = 0 : i64, scratch_operands = 0 : i64, tpu.core_type = #tpu.core_type<tc>, window_params = [{transform_indices = @transform_0, window_bounds = array<i64: 8, 128>}, {transform_indices = @transform_1, window_bounds = array<i64: 1>}, {transform_indices = @transform_2, window_bounds = array<i64: 1>}, {transform_indices = @transform_3, window_bounds = array<i64: 8, 128>}]} {
    %c0 = arith.constant 0 : index
    %c0_0 = arith.constant 0 : index
    %0 = vector.load %arg1[%c0, %c0_0] : memref<8x128xf32, #tpu.memory_space<vmem>>, vector<8x128xf32>
    %c0_1 = arith.constant 0 : index
    %1 = memref.load %arg2[%c0_1] : memref<1xf32, #tpu.memory_space<smem>>
    %2 = vector.broadcast %1 : f32 to vector<8x128xf32>
    %3 = arith.mulf %0, %2 : vector<8x128xf32>
    %c0_2 = arith.constant 0 : index
    %4 = memref.load %arg3[%c0_2] : memref<1xf32, #tpu.memory_space<smem>>
    %5 = vector.broadcast %4 : f32 to vector<8x128xf32>
    %6 = arith.addf %3, %5 : vector<8x128xf32>
    %c0_3 = arith.constant 0 : index
    %c0_4 = arith.constant 0 : index
    %7 = vector.load %arg4[%c0_3, %c0_4] : memref<8x128xf32, #tpu.memory_space<vmem>>, vector<8x128xf32>
    tpu.vector_store %arg4[%c0_3, %c0_4], %6 {strides = array<i32>} : memref<8x128xf32, #tpu.memory_space<vmem>>, vector<8x128xf32>,
    return
  }
  func.func @transform_0(%arg0: i32) -> (i32, i32) {
    %c0_i32 = arith.constant 0 : i32
    %c0_i32_0 = arith.constant 0 : i32
    return %arg0, %c0_i32 : i32, i32
  }
  func.func @transform_1(%arg0: i32) -> i32 {
    %c0_i32 = arith.constant 0 : i32
    %c0_i32_0 = arith.constant 0 : i32
    return %c0_i32 : i32
  }
  func.func @transform_2(%arg0: i32) -> i32 {
    %c0_i32 = arith.constant 0 : i32
    %c0_i32_0 = arith.constant 0 : i32
    return %c0_i32 : i32
  }
  func.func @transform_3(%arg0: i32) -> (i32, i32) {
    %c0_i32 = arith.constant 0 : i32
    %c0_i32_0 = arith.constant 0 : i32
    return %arg0, %c0_i32 : i32, i32
  }
}

</mosaic_0001>

<llo_original>
// kernel: tpu_custom_call.1
$region0: #{tpu_custom_call.1}
  #allocation0 [shape = 'u32[]', space=smem, size = 0x4, offset = 0x4, fixed_abs, tag = 'smem constant byte address 0x4 - core index']
  #allocation1 [shape = 'u32[144,128]{1,0:T(1,128)}', space=vmem, size = 0x12000, scoped, tag = 'internal scratch']
  #allocation2 [shape = 'f32[1]{0:T(128)S(6)}', space=smem, size = 0x200, scoped, tag = 'scoped memory for tpu_custom_call.1']
  #allocation3 [shape = 'f32[1]{0:T(128)S(6)}', space=smem, size = 0x200, scoped, tag = 'scoped memory for tpu_custom_call.1']
  %s0 = inlined_call_operand.hbm [shape: f32[8,128], index: 0, kind: input, shape index: {}]
  %s1 = inlined_call_operand.<no memory space> [shape: f32[1], index: 1, kind: input, shape index: {}]
  %s2 = inlined_call_operand.<no memory space> [shape: f32[1], index: 2, kind: input, shape index: {}]
  %s3 = inlined_call_operand.hbm [shape: f32[8,128], index: 3, kind: output, shape index: {}]
  %s4 = sld [smem:[#allocation0]]
  $region26: #{tpu_custom_call.1} parent=0
    _
  %s6 = ssub.s32 1, %s4
  %s7 = scalar_select 0, %s6, %s4
  %8 = sst [smem:[#allocation2]] %s1
  %9 = sst [smem:[#allocation3]] %s2
  $region1: #{tpu_custom_call.1} parent=0
    #allocation4 [shape = 'u8[4096]{0}', space=vmem, size = 0x1000, scoped, tag = 'input window, operand 0, single buffered']
    #allocation5 [shape = 's32[1]{0}', space=sflag, size = 0x4, scoped, tag = 'scoped memory for tpu_custom_call.1']
    #allocation6 [shape = 's32[1]{0}', space=sflag, size = 0x4, scoped, tag = 'scoped memory for tpu_custom_call.1']
    #allocation7 [shape = 'u8[4096]{0}', space=vmem, size = 0x1000, scoped, tag = 'output window, operand 0, single buffered']
    %10 = vsyncpa [#allocation5], 0
    %11 = vsyncpa [#allocation6], 0
    // Predicated region
    $region2: #{tpu_custom_call.1} parent=1 // pred_check
      _
    $region3: #{tpu_custom_call.1} parent=1 // pred_check_branch
      %13 = sbr.rel (0) target = $region5
    $region4: #{tpu_custom_call.1} parent=1 // pred_region
      %s15 = ssub.s32 128, 128
      %16 = vsyncadd [#allocation5], %s15
      %s18 = sshll.u32 [#allocation4], 4
      %s19 = int_to_ptr.vmem [resolvable:$true] %s18
      %21 = dma.hbm_to_vmem [thread:$0]  %s0, 128, %s19, [#allocation5]
    $region5: #{tpu_custom_call.1} parent=1 // pred_fallthru
      _
    // Predicated region
    $region6: #{tpu_custom_call.1} parent=1 // pred_check
      _
    $region7: #{tpu_custom_call.1} parent=1 // pred_check_branch
      %23 = sbr.rel (0) target = $region9
    $region8: #{tpu_custom_call.1} parent=1 // pred_region
      _
    $region9: #{tpu_custom_call.1} parent=1 // pred_fallthru
      _
    // Predicated region
    $region10: #{tpu_custom_call.1} parent=1 // pred_check
      _
    $region11: #{tpu_custom_call.1} parent=1 // pred_check_branch
      %25 = sbr.rel (0) target = $region13
    $region12: #{tpu_custom_call.1} parent=1 // pred_region
      _
    $region13: #{tpu_custom_call.1} parent=1 // pred_fallthru
      _
    // Predicated region
    $region14: #{tpu_custom_call.1} parent=1 // pred_check
      _
    $region15: #{tpu_custom_call.1} parent=1 // pred_check_branch
      %27 = sbr.rel (0) target = $region17
    $region16: #{tpu_custom_call.1} parent=1 // pred_region
      %28 = dma.done [#allocation5], 128
    $region17: #{tpu_custom_call.1} parent=1 // pred_fallthru
      _
    %v29 = vld [vmem:[#allocation4] sm:$0xff]
    %s30 = sld [smem:[#allocation2]]
    %v31 = vstv %s30
    %v32 = vmul.f32 %v29, %v31
    %s33 = sld [smem:[#allocation3]]
    %v34 = vstv %s33
    %v35 = vadd.f32 %v32, %v34
    %36 = vst [vmem:[#allocation7] sm:$0xff] %v35
    // Predicated region
    $region18: #{tpu_custom_call.1} parent=1 // pred_check
      _
    $region19: #{tpu_custom_call.1} parent=1 // pred_check_branch
      %38 = sbr.rel (0) target = $region21
    $region20: #{tpu_custom_call.1} parent=1 // pred_region
      %s40 = ssub.s32 128, 128
      %41 = vsyncadd [#allocation6], %s40
      %s43 = sshll.u32 [#allocation7], 4
      %s44 = int_to_ptr.vmem [resolvable:$true] %s43
      %46 = dma.vmem_to_hbm [thread:$0]  %s44, 128, %s3, [#allocation6]
    $region21: #{tpu_custom_call.1} parent=1 // pred_fallthru
      _
    // Predicated region
    $region22: #{tpu_custom_call.1} parent=1 // pred_check
      _
    $region23: #{tpu_custom_call.1} parent=1 // pred_check_branch
      %48 = sbr.rel (0) target = $region25
    $region24: #{tpu_custom_call.1} parent=1 // pred_region
      %49 = dma.done [#allocation6], 128
    $region25: #{tpu_custom_call.1} parent=1 // pred_fallthru
      _
    %50 = vsyncpa [#allocation5], 1
    %51 = vsyncpa [#allocation6], 1

</llo_original>
